<compile_context>
chip_gen: v7x
topology: tpu7x:2x2x1
jax: 0.10.0
libtpu: 0.0.40
codegen_flags: <defaults>
</compile_context>

<pallas_src>
import math

import jax
import jax.numpy as jnp
from jax import lax
from jax.experimental import pallas as pl
from jax.experimental.pallas import tpu as pltpu


def _pair_add_kernel(a_ref, c_ref, o_ref):
    """o[r, :, :] = a[r, :] + c[:, :] for every row r of this tile.

    a_ref: (TI, K) f32  -- row term   A[b, i-tile]
    c_ref: (TJ, K) f32  -- col term   C[b, j-tile]   (bias already folded in)
    o_ref: (TI, TJ, K)  -- output tile (lane-dense, K multiple of 128)
    """
    c = c_ref[...]                                   # (TJ, K): ~TJ*K/1024 vregs, stays resident
    n_rows = a_ref.shape[0]

    def row(r, carry):
        a_r = a_ref[pl.ds(r, 1), :]                  # (1, K) sublane row of A
        o_ref[r] = (a_r + c).astype(o_ref.dtype)     # (TJ, K) broadcast-add + unmasked stores
        return carry

    # Row loop bounds live ranges (per review: keeps c resident, avoids
    # materializing the full (TI,TJ,K) broadcast); moderate unroll keeps the
    # store slot fed without blowing up code size at TI=128.
    lax.fori_loop(0, n_rows, row, 0, unroll=min(8, max(n_rows, 1)))


def _fit_tile(L, cap):
    """Tile along a length-L axis: the whole axis if small, else the cap.

    The cap is a multiple of 8 (sublane-legal BlockSpec); a ragged last block
    (L % cap != 0) is handled by the pl.cdiv grid + Pallas boundary masking —
    never by a whole-axis fallback block that could blow past VMEM.
    """
    return L if L <= cap else cap


def pair_emb_wo_templ(seq, idx, emb_table, proj_w, proj_b, *,
                      tile_i=128, tile_j=256, out_dtype=None):
    """Forward of Pair_emb_wo_templ (dropout = identity).

    seq:       (B, L) int32 token ids
    idx:       (B, L) residue indices
    emb_table: (d_seq, d_model // 2) embedding weights
    proj_w:    (d_model, d_model) nn.Linear weight [out, in]
    proj_b:    (d_model,) nn.Linear bias
    returns:   (B, L, L, d_model)
    """
    B, L = seq.shape
    d_model = proj_w.shape[0]
    d_emb = d_model // 2
    if out_dtype is None:
        out_dtype = emb_table.dtype          # pass jnp.bfloat16 here for a ~2x write-BW win

    # ---- O(B*L*K) precompute, hoisted out of the O(B*L^2*K) kernel ----------
    f32 = jnp.float32
    seq_emb = emb_table[seq].astype(f32)                              # (B, L, d_emb)
    wt = proj_w.astype(f32).T                                         # (in, out)
    wl, wr = wt[:d_emb], wt[d_emb:]

    d_half = d_model // 2
    div_term = jnp.exp(jnp.arange(0.0, d_half, 2.0, dtype=f32)
                       * (-math.log(10000.0) / d_half))               # (d_half // 2,)
    sin_inp = idx.astype(f32)[..., None] * div_term                   # (B, L, d_half // 2)
    pos = jnp.concatenate([jnp.sin(sin_inp), jnp.cos(sin_inp)], axis=-1)   # (B, L, d_half)
    zeros = jnp.zeros_like(pos)

    a_full = (jnp.dot(seq_emb, wl, precision=lax.Precision.HIGHEST)
              + jnp.concatenate([pos, zeros], axis=-1))                         # (B, L, K)
    c_full = (jnp.dot(seq_emb, wr, precision=lax.Precision.HIGHEST)
              + jnp.concatenate([zeros, pos], axis=-1)
              + proj_b.astype(f32))                                             # (B, L, K)

    # ---- tiling: fixed caps + cdiv grid (ragged last block masked by Pallas) -
    if L > tile_i:
        assert tile_i % 8 == 0, "tile_i must be a multiple of 8"
    if L > tile_j:
        assert tile_j % 8 == 0, "tile_j must be a multiple of 8"
    ti = _fit_tile(L, tile_i)
    tj = _fit_tile(L, tile_j)
    grid = (B, pl.cdiv(L, ti), pl.cdiv(L, tj))

    out_itemsize = jnp.dtype(out_dtype).itemsize
    out_block_bytes = ti * tj * d_model * out_itemsize
    in_block_bytes = (ti + tj) * d_model * 4
    # Double-buffered blocks + headroom.  Defaults (128x256 f32 -> 16 MiB block)
    # land at ~41 MiB: safe inside v7x's 64 MiB and v5e/v6e's 128 MiB VMEM.
    vmem_limit = int(min(2 * (out_block_bytes + in_block_bytes) + (8 << 20),
                         100 << 20))

    return pl.pallas_call(
        _pair_add_kernel,
        out_shape=jax.ShapeDtypeStruct((B, L, L, d_model), out_dtype),
        grid_spec=pltpu.PrefetchScalarGridSpec(
            num_scalar_prefetch=0,
            grid=grid,
            in_specs=[
                pl.BlockSpec((None, ti, d_model), lambda b, i, j: (b, i, 0)),  # A rows
                pl.BlockSpec((None, tj, d_model), lambda b, i, j: (b, j, 0)),  # C cols
            ],
            out_specs=pl.BlockSpec((None, ti, tj, d_model),
                                   lambda b, i, j: (b, i, j, 0)),
        ),
        compiler_params=pltpu.CompilerParams(
            # No cross-step accumulation: every grid point writes a distinct
            # output block, so all three axes can shard across cores (v7x).
            dimension_semantics=("parallel", "parallel", "parallel"),
            vmem_limit_bytes=vmem_limit,
        ),
        cost_estimate=pl.CostEstimate(
            flops=B * L * L * d_model,
            transcendentals=0,
            bytes_accessed=(B * L * L * d_model * out_itemsize
                            + 2 * B * L * d_model * 4),
        ),
    )(a_full, c_full)


def pair_emb_wo_templ_reference(seq, idx, emb_table, proj_w, proj_b):
    """Pure-JAX reference matching the PyTorch forward (dropout = identity)."""
    B, L = seq.shape
    d_model = proj_w.shape[0]
    k_half = d_model // 2

    seq_emb = emb_table[seq].astype(jnp.float32)                         # (B, L, d_emb)
    left = jnp.broadcast_to(seq_emb[:, :, None, :], (B, L, L, k_half))
    right = jnp.broadcast_to(seq_emb[:, None, :, :], (B, L, L, k_half))
    pair = jnp.concatenate([left, right], axis=-1)                       # (B, L, L, K)
    pair = jnp.dot(pair, proj_w.astype(jnp.float32).T,
                   precision=lax.Precision.HIGHEST) + proj_b.astype(jnp.float32)

    d_half = d_model // 2
    div_term = jnp.exp(jnp.arange(0.0, d_half, 2.0, dtype=jnp.float32)
                       * (-math.log(10000.0) / d_half))
    sin_inp = idx.astype(jnp.float32)[..., None] * div_term
    emb_pos = jnp.concatenate([jnp.sin(sin_inp), jnp.cos(sin_inp)], axis=-1)  # (B, L, k_half)
    pe = jnp.concatenate([
        jnp.broadcast_to(emb_pos[:, :, None, :], (B, L, L, k_half)),
        jnp.broadcast_to(emb_pos[:, None, :, :], (B, L, L, k_half)),
    ], axis=-1)
    return pair + pe


if __name__ == "__main__":
    key = jax.random.PRNGKey(0)
    k_emb, k_w, k_b, k_seq = jax.random.split(key, 4)

    B, L = 2, 32
    d_model, d_seq = 128, 21            # module defaults
    d_emb = d_model // 2

    emb_table = jax.random.normal(k_emb, (d_seq, d_emb), dtype=jnp.float32)
    proj_w = jax.random.normal(k_w, (d_model, d_model), dtype=jnp.float32) / math.sqrt(d_model)
    proj_b = jax.random.normal(k_b, (d_model,), dtype=jnp.float32) * 0.01
    seq = jax.random.randint(k_seq, (B, L), 0, d_seq, dtype=jnp.int32)
    idx = jnp.broadcast_to(jnp.arange(L, dtype=jnp.int32)[None, :], (B, L))

    ref = pair_emb_wo_templ_reference(seq, idx, emb_table, proj_w, proj_b)

    # Small tiles so the 3-D grid / index maps are actually exercised
    # (production defaults are ti=128, tj=256 -> 16 MiB lane-dense output blocks).
    out = pair_emb_wo_templ(seq, idx, emb_table, proj_w, proj_b, tile_i=8, tile_j=16)
    out = jax.block_until_ready(out)
    assert out.shape == (B, L, L, d_model)
    assert jnp.allclose(out, ref, atol=1e-3, rtol=1e-3), "mismatch vs reference (tiled)"

    # Default tile path (single block per batch at this small L).
    out2 = pair_emb_wo_templ(seq, idx, emb_table, proj_w, proj_b)
    out2 = jax.block_until_ready(out2)
    assert jnp.allclose(out2, ref, atol=1e-3, rtol=1e-3), "mismatch vs reference (default tiles)"

    print("KERNEL_OK")
</pallas_src>

<mosaic_0001>
module attributes {stable_mosaic.version = 11 : i64} {
  func.func @_pair_add_kernel(%arg0: i32, %arg1: i32, %arg2: i32, %arg3: memref<1x8x128xf32, #tpu.memory_space<vmem>>, %arg4: memref<1x16x128xf32, #tpu.memory_space<vmem>>, %arg5: memref<1x8x16x128xf32, #tpu.memory_space<vmem>>) attributes {dimension_semantics = [#tpu.dimension_semantics<parallel>, #tpu.dimension_semantics<parallel>, #tpu.dimension_semantics<parallel>], iteration_bounds = array<i64: 2, 4, 2>, scalar_prefetch = 0 : i64, scratch_operands = 0 : i64, tpu.core_type = #tpu.core_type<tc>, window_params = [{transform_indices = @transform_0, window_bounds = array<i64: 1, 8, 128>}, {transform_indices = @transform_1, window_bounds = array<i64: 1, 16, 128>}, {transform_indices = @transform_2, window_bounds = array<i64: 1, 8, 16, 128>}]} {
    %c0 = arith.constant 0 : index
    %c0_0 = arith.constant 0 : index
    %c0_1 = arith.constant 0 : index
    %0 = vector.load %arg4[%c0, %c0_0, %c0_1] : memref<1x16x128xf32, #tpu.memory_space<vmem>>, vector<1x16x128xf32>
    %1 = vector.shape_cast %0 : vector<1x16x128xf32> to vector<16x128xf32>
    %c0_i32 = arith.constant 0 : i32
    %c0_2 = arith.constant 0 : index
    %2 = arith.index_cast %c0_i32 : i32 to index
    %c0_3 = arith.constant 0 : index
    %3 = vector.load %arg3[%c0_2, %2, %c0_3] : memref<1x8x128xf32, #tpu.memory_space<vmem>>, vector<1x1x128xf32>
    %4 = vector.shape_cast %3 : vector<1x1x128xf32> to vector<1x128xf32>
    %5 = vector.broadcast %4 : vector<1x128xf32> to vector<16x128xf32>
    %6 = arith.addf %5, %1 : vector<16x128xf32>
    %c0_4 = arith.constant 0 : index
    %7 = arith.index_cast %c0_i32 : i32 to index
    %c0_5 = arith.constant 0 : index
    %c0_6 = arith.constant 0 : index
    %8 = vector.load %arg5[%c0_4, %7, %c0_5, %c0_6] : memref<1x8x16x128xf32, #tpu.memory_space<vmem>>, vector<1x1x16x128xf32>
    %9 = vector.shape_cast %8 : vector<1x1x16x128xf32> to vector<16x128xf32>
    %10 = vector.shape_cast %6 : vector<16x128xf32> to vector<1x1x16x128xf32>
    tpu.vector_store %arg5[%c0_4, %7, %c0_5, %c0_6], %10 {strides = array<i32>} : memref<1x8x16x128xf32, #tpu.memory_space<vmem>>, vector<1x1x16x128xf32>,
    %c1_i32 = arith.constant 1 : i32
    %c0_7 = arith.constant 0 : index
    %11 = arith.index_cast %c1_i32 : i32 to index
    %c0_8 = arith.constant 0 : index
    %12 = vector.load %arg3[%c0_7, %11, %c0_8] : memref<1x8x128xf32, #tpu.memory_space<vmem>>, vector<1x1x128xf32>
    %13 = vector.shape_cast %12 : vector<1x1x128xf32> to vector<1x128xf32>
    %14 = vector.broadcast %13 : vector<1x128xf32> to vector<16x128xf32>
    %15 = arith.addf %14, %1 : vector<16x128xf32>
    %c0_9 = arith.constant 0 : index
    %16 = arith.index_cast %c1_i32 : i32 to index
    %c0_10 = arith.constant 0 : index
    %c0_11 = arith.constant 0 : index
    %17 = vector.load %arg5[%c0_9, %16, %c0_10, %c0_11] : memref<1x8x16x128xf32, #tpu.memory_space<vmem>>, vector<1x1x16x128xf32>
    %18 = vector.shape_cast %17 : vector<1x1x16x128xf32> to vector<16x128xf32>
    %19 = vector.shape_cast %15 : vector<16x128xf32> to vector<1x1x16x128xf32>
    tpu.vector_store %arg5[%c0_9, %16, %c0_10, %c0_11], %19 {strides = array<i32>} : memref<1x8x16x128xf32, #tpu.memory_space<vmem>>, vector<1x1x16x128xf32>,
    %c2_i32 = arith.constant 2 : i32
    %c0_12 = arith.constant 0 : index
    %20 = arith.index_cast %c2_i32 : i32 to index
    %c0_13 = arith.constant 0 : index
    %21 = vector.load %arg3[%c0_12, %20, %c0_13] : memref<1x8x128xf32, #tpu.memory_space<vmem>>, vector<1x1x128xf32>
    %22 = vector.shape_cast %21 : vector<1x1x128xf32> to vector<1x128xf32>
    %23 = vector.broadcast %22 : vector<1x128xf32> to vector<16x128xf32>
    %24 = arith.addf %23, %1 : vector<16x128xf32>
    %c0_14 = arith.constant 0 : index
    %25 = arith.index_cast %c2_i32 : i32 to index
    %c0_15 = arith.constant 0 : index
    %c0_16 = arith.constant 0 : index
    %26 = vector.load %arg5[%c0_14, %25, %c0_15, %c0_16] : memref<1x8x16x128xf32, #tpu.memory_space<vmem>>, vector<1x1x16x128xf32>
    %27 = vector.shape_cast %26 : vector<1x1x16x128xf32> to vector<16x128xf32>
    %28 = vector.shape_cast %24 : vector<16x128xf32> to vector<1x1x16x128xf32>
    tpu.vector_store %arg5[%c0_14, %25, %c0_15, %c0_16], %28 {strides = array<i32>} : memref<1x8x16x128xf32, #tpu.memory_space<vmem>>, vector<1x1x16x128xf32>,
    %c3_i32 = arith.constant 3 : i32
    %c0_17 = arith.constant 0 : index
    %29 = arith.index_cast %c3_i32 : i32 to index
    %c0_18 = arith.constant 0 : index
    %30 = vector.load %arg3[%c0_17, %29, %c0_18] : memref<1x8x128xf32, #tpu.memory_space<vmem>>, vector<1x1x128xf32>
    %31 = vector.shape_cast %30 : vector<1x1x128xf32> to vector<1x128xf32>
    %32 = vector.broadcast %31 : vector<1x128xf32> to vector<16x128xf32>
    %33 = arith.addf %32, %1 : vector<16x128xf32>
    %c0_19 = arith.constant 0 : index
    %34 = arith.index_cast %c3_i32 : i32 to index
    %c0_20 = arith.constant 0 : index
    %c0_21 = arith.constant 0 : index
    %35 = vector.load %arg5[%c0_19, %34, %c0_20, %c0_21] : memref<1x8x16x128xf32, #tpu.memory_space<vmem>>, vector<1x1x16x128xf32>
    %36 = vector.shape_cast %35 : vector<1x1x16x128xf32> to vector<16x128xf32>
    %37 = vector.shape_cast %33 : vector<16x128xf32> to vector<1x1x16x128xf32>
    tpu.vector_store %arg5[%c0_19, %34, %c0_20, %c0_21], %37 {strides = array<i32>} : memref<1x8x16x128xf32, #tpu.memory_space<vmem>>, vector<1x1x16x128xf32>,
    %c4_i32 = arith.constant 4 : i32
    %c0_22 = arith.constant 0 : index
    %38 = arith.index_cast %c4_i32 : i32 to index
    %c0_23 = arith.constant 0 : index
    %39 = vector.load %arg3[%c0_22, %38, %c0_23] : memref<1x8x128xf32, #tpu.memory_space<vmem>>, vector<1x1x128xf32>
    %40 = vector.shape_cast %39 : vector<1x1x128xf32> to vector<1x128xf32>
    %41 = vector.broadcast %40 : vector<1x128xf32> to vector<16x128xf32>
    %42 = arith.addf %41, %1 : vector<16x128xf32>
    %c0_24 = arith.constant 0 : index
    %43 = arith.index_cast %c4_i32 : i32 to index
    %c0_25 = arith.constant 0 : index
    %c0_26 = arith.constant 0 : index
    %44 = vector.load %arg5[%c0_24, %43, %c0_25, %c0_26] : memref<1x8x16x128xf32, #tpu.memory_space<vmem>>, vector<1x1x16x128xf32>
    %45 = vector.shape_cast %44 : vector<1x1x16x128xf32> to vector<16x128xf32>
    %46 = vector.shape_cast %42 : vector<16x128xf32> to vector<1x1x16x128xf32>
    tpu.vector_store %arg5[%c0_24, %43, %c0_25, %c0_26], %46 {strides = array<i32>} : memref<1x8x16x128xf32, #tpu.memory_space<vmem>>, vector<1x1x16x128xf32>,
    %c5_i32 = arith.constant 5 : i32
    %c0_27 = arith.constant 0 : index
    %47 = arith.index_cast %c5_i32 : i32 to index
    %c0_28 = arith.constant 0 : index
    %48 = vector.load %arg3[%c0_27, %47, %c0_28] : memref<1x8x128xf32, #tpu.memory_space<vmem>>, vector<1x1x128xf32>
    %49 = vector.shape_cast %48 : vector<1x1x128xf32> to vector<1x128xf32>
    %50 = vector.broadcast %49 : vector<1x128xf32> to vector<16x128xf32>
    %51 = arith.addf %50, %1 : vector<16x128xf32>
    %c0_29 = arith.constant 0 : index
    %52 = arith.index_cast %c5_i32 : i32 to index
    %c0_30 = arith.constant 0 : index
    %c0_31 = arith.constant 0 : index
    %53 = vector.load %arg5[%c0_29, %52, %c0_30, %c0_31] : memref<1x8x16x128xf32, #tpu.memory_space<vmem>>, vector<1x1x16x128xf32>
    %54 = vector.shape_cast %53 : vector<1x1x16x128xf32> to vector<16x128xf32>
    %55 = vector.shape_cast %51 : vector<16x128xf32> to vector<1x1x16x128xf32>
    tpu.vector_store %arg5[%c0_29, %52, %c0_30, %c0_31], %55 {strides = array<i32>} : memref<1x8x16x128xf32, #tpu.memory_space<vmem>>, vector<1x1x16x128xf32>,
    %c6_i32 = arith.constant 6 : i32
    %c0_32 = arith.constant 0 : index
    %56 = arith.index_cast %c6_i32 : i32 to index
    %c0_33 = arith.constant 0 : index
    %57 = vector.load %arg3[%c0_32, %56, %c0_33] : memref<1x8x128xf32, #tpu.memory_space<vmem>>, vector<1x1x128xf32>
    %58 = vector.shape_cast %57 : vector<1x1x128xf32> to vector<1x128xf32>
    %59 = vector.broadcast %58 : vector<1x128xf32> to vector<16x128xf32>
    %60 = arith.addf %59, %1 : vector<16x128xf32>
    %c0_34 = arith.constant 0 : index
    %61 = arith.index_cast %c6_i32 : i32 to index
    %c0_35 = arith.constant 0 : index
    %c0_36 = arith.constant 0 : index
    %62 = vector.load %arg5[%c0_34, %61, %c0_35, %c0_36] : memref<1x8x16x128xf32, #tpu.memory_space<vmem>>, vector<1x1x16x128xf32>
    %63 = vector.shape_cast %62 : vector<1x1x16x128xf32> to vector<16x128xf32>
    %64 = vector.shape_cast %60 : vector<16x128xf32> to vector<1x1x16x128xf32>
    tpu.vector_store %arg5[%c0_34, %61, %c0_35, %c0_36], %64 {strides = array<i32>} : memref<1x8x16x128xf32, #tpu.memory_space<vmem>>, vector<1x1x16x128xf32>,
    %c7_i32 = arith.constant 7 : i32
    %c0_37 = arith.constant 0 : index
    %65 = arith.index_cast %c7_i32 : i32 to index
    %c0_38 = arith.constant 0 : index
    %66 = vector.load %arg3[%c0_37, %65, %c0_38] : memref<1x8x128xf32, #tpu.memory_space<vmem>>, vector<1x1x128xf32>
    %67 = vector.shape_cast %66 : vector<1x1x128xf32> to vector<1x128xf32>
    %68 = vector.broadcast %67 : vector<1x128xf32> to vector<16x128xf32>
    %69 = arith.addf %68, %1 : vector<16x128xf32>
    %c0_39 = arith.constant 0 : index
    %70 = arith.index_cast %c7_i32 : i32 to index
    %c0_40 = arith.constant 0 : index
    %c0_41 = arith.constant 0 : index
    %71 = vector.load %arg5[%c0_39, %70, %c0_40, %c0_41] : memref<1x8x16x128xf32, #tpu.memory_space<vmem>>, vector<1x1x16x128xf32>
    %72 = vector.shape_cast %71 : vector<1x1x16x128xf32> to vector<16x128xf32>
    %73 = vector.shape_cast %69 : vector<16x128xf32> to vector<1x1x16x128xf32>
    tpu.vector_store %arg5[%c0_39, %70, %c0_40, %c0_41], %73 {strides = array<i32>} : memref<1x8x16x128xf32, #tpu.memory_space<vmem>>, vector<1x1x16x128xf32>,
    %c8_i32 = arith.constant 8 : i32
    return
  }
  func.func @transform_0(%arg0: i32, %arg1: i32, %arg2: i32) -> (i32, i32, i32) {
    %c0_i32 = arith.constant 0 : i32
    %c0_i32_0 = arith.constant 0 : i32
    return %arg0, %arg1, %c0_i32 : i32, i32, i32
  }
  func.func @transform_1(%arg0: i32, %arg1: i32, %arg2: i32) -> (i32, i32, i32) {
    %c0_i32 = arith.constant 0 : i32
    %c0_i32_0 = arith.constant 0 : i32
    return %arg0, %arg2, %c0_i32 : i32, i32, i32
  }
  func.func @transform_2(%arg0: i32, %arg1: i32, %arg2: i32) -> (i32, i32, i32, i32) {
    %c0_i32 = arith.constant 0 : i32
    %c0_i32_0 = arith.constant 0 : i32
    return %arg0, %arg1, %arg2, %c0_i32 : i32, i32, i32, i32
  }
}

</mosaic_0001>

<llo_original>
// kernel: tpu_custom_call.1
$region0: #{tpu_custom_call.1}
  #allocation0 [shape = 'u32[]', space=smem, size = 0x4, offset = 0x4, fixed_abs, tag = 'smem constant byte address 0x4 - core index']
  #allocation1 [shape = 'u32[144,128]{1,0:T(1,128)}', space=vmem, size = 0x12000, scoped, tag = 'internal scratch']
  #allocation8 [shape = 's32[]', space=sflag, size = 0x4, offset = 0, fixed_abs, tag = 'sflag constant byte address 0x0 - dummy sync flag']
  %s0 = inlined_call_operand.hbm [shape: f32[2,32,128], index: 0, kind: input, shape index: {}]
  %s1 = inlined_call_operand.hbm [shape: f32[2,32,128], index: 1, kind: input, shape index: {}]
  %s2 = inlined_call_operand.hbm [shape: f32[2,32,32,128], index: 2, kind: output, shape index: {}]
  %s3 = sld [smem:[#allocation0]]
  $region49: #{tpu_custom_call.1} parent=0
    _
  %s5 = ssub.s32 1, %s3
  %s6 = scalar_select 0, %s5, %s3
  $region1: #{tpu_custom_call.1} parent=0
    #allocation2 [shape = 'u8[8192]{0}', space=vmem, size = 0x2000, scoped, tag = 'input window, operand 0']
    #allocation3 [shape = 's32[2]{0}', space=sflag, size = 0x8, scoped, tag = 'scoped memory for tpu_custom_call.1']
    #allocation4 [shape = 's32[2]{0}', space=sflag, size = 0x8, scoped, tag = 'scoped memory for tpu_custom_call.1']
    #allocation5 [shape = 'u8[16384]{0}', space=vmem, size = 0x4000, scoped, tag = 'input window, operand 1']
    #allocation6 [shape = 's32[2]{0}', space=sflag, size = 0x8, scoped, tag = 'scoped memory for tpu_custom_call.1']
    #allocation7 [shape = 'u8[131072]{0}', space=vmem, size = 0x20000, scoped, tag = 'output window, operand 0']
    %7 = vsyncpa [#allocation3], 0
    %s8 = scalar_lea.sflag [#allocation3], 1
    %9 = vsyncpa %s8, 0
    %10 = vsyncpa [#allocation6], 0
    %s11 = scalar_lea.sflag [#allocation6], 1
    %12 = vsyncpa %s11, 0
    %13 = vsyncpa [#allocation4], 0
    %s14 = scalar_lea.sflag [#allocation4], 1
    %15 = vsyncpa %s14, 0
    loop: start=0, step=1, limit=18
    $region2: #{tpu_custom_call.1} parent=1 // loop_pre_header
      _
    $region3: #{tpu_custom_call.1} parent=1 // loop_header
      %s17 = sphi 0, %s21
      %p18 = scmp.ge.s32.totalorder %s17, 18
      %s24 = sphi 0, %s43
      %s25 = sphi 0, %s39
      %s26 = sphi 0, %s35
      %s27 = sphi 0, %s24
      %s28 = sphi 0, %s25
      %s29 = sphi 0, %s26
      %s30 = sphi 0, %s27
      %s31 = sphi 0, %s28
      %s32 = sphi 0, %s29
      %s48 = sphi 0, %s50
      %s51 = sphi 0, %s48
      %s52 = sphi 0, %s51
      %s68 = sphi 0, %s52
      %s76 = sphi 0, %s78
      %s79 = sphi 0, %s76
      %s80 = sphi 0, %s79
      %s96 = sphi 0, %s80
      %s106 = sphi 0, %s108
      %s109 = sphi 0, %s106
      %s110 = sphi 0, %s109
      %s126 = sphi 0, %s110
    $region4: #{tpu_custom_call.1} parent=1 // loop_header_branch
      %20 = sbr.rel (%p18) target = $region8
    $region5: #{tpu_custom_call.1} parent=1 // loop_body
      %s22 = ssub.s32 %s17, 1
      %s23 = ssub.s32 %s17, 2
      %s33 = sadd.s32 1, %s26
      %p34 = scmp.ge.s32.totalorder %s33, 2
      %s35 = scalar_select %p34, 0, %s33
      %s36 = sadd.s32 1, %s25
      %s37 = scalar_select %p34, %s36, %s25
      %p38 = scmp.ge.s32.totalorder %s37, 4
      %s39 = scalar_select %p38, 0, %s37
      %s40 = sadd.s32 1, %s24
      %s41 = scalar_select %p38, %s40, %s24
      %p42 = scmp.ge.s32.totalorder %s41, 2
      %s43 = scalar_select %p42, 0, %s41
      %s44 = ssub.s32 %s24, %s43
      %s45 = ssub.s32 %s25, %s39
      %s46 = sor.u32 %s44, %s45
      %p47 = scmp.eq.s32.totalorder %s46, 0
      %s49 = sadd.s32 %s48, 1
      %s50 = scalar_select %p47, %s48, %s49
      %p53 = pneg %p47
      %p54 = scmp.eq.s32.totalorder %s17, 15
      %p55 = por %p53, %p54
      %p56 = scmp.ne.s32.totalorder %s48, %s51
      %p57 = scmp.eq.s32.totalorder %s17, 0
      %p58 = por %p56, %p57
      %p59 = scmp.ne.s32.totalorder %s48, %s51
      %p60 = scmp.eq.s32.totalorder %s22, 15
      %p61 = por %p59, %p60
      %p62 = scmp.ne.s32.totalorder %s51, %s52
      %p63 = scmp.eq.s32.totalorder %s22, 0
      %p64 = por %p62, %p63
      %p65 = scmp.ne.s32.totalorder %s51, %s52
      %p66 = scmp.eq.s32.totalorder %s23, 15
      %p67 = por %p65, %p66
      %p69 = scmp.ne.s32.totalorder %s52, %s68
      %p70 = scmp.eq.s32.totalorder %s23, 0
      %p71 = por %p69, %p70
      %s72 = ssub.s32 %s24, %s43
      %s73 = ssub.s32 %s26, %s35
      %s74 = sor.u32 %s72, %s73
      %p75 = scmp.eq.s32.totalorder %s74, 0
      %s77 = sadd.s32 %s76, 1
      %s78 = scalar_select %p75, %s76, %s77
      %p81 = pneg %p75
      %p82 = scmp.eq.s32.totalorder %s17, 15
      %p83 = por %p81, %p82
      %p84 = scmp.ne.s32.totalorder %s76, %s79
      %p85 = scmp.eq.s32.totalorder %s17, 0
      %p86 = por %p84, %p85
      %p87 = scmp.ne.s32.totalorder %s76, %s79
      %p88 = scmp.eq.s32.totalorder %s22, 15
      %p89 = por %p87, %p88
      %p90 = scmp.ne.s32.totalorder %s79, %s80
      %p91 = scmp.eq.s32.totalorder %s22, 0
      %p92 = por %p90, %p91
      %p93 = scmp.ne.s32.totalorder %s79, %s80
      %p94 = scmp.eq.s32.totalorder %s23, 15
      %p95 = por %p93, %p94
      %p97 = scmp.ne.s32.totalorder %s80, %s96
      %p98 = scmp.eq.s32.totalorder %s23, 0
      %p99 = por %p97, %p98
      %s100 = ssub.s32 %s24, %s43
      %s101 = ssub.s32 %s25, %s39
      %s102 = sor.u32 %s100, %s101
      %s103 = ssub.s32 %s26, %s35
      %s104 = sor.u32 %s102, %s103
      %p105 = scmp.eq.s32.totalorder %s104, 0
      %s107 = sadd.s32 %s106, 1
      %s108 = scalar_select %p105, %s106, %s107
      %p111 = pneg %p105
      %p112 = scmp.eq.s32.totalorder %s17, 15
      %p113 = por %p111, %p112
      %p114 = scmp.ne.s32.totalorder %s106, %s109
      %p115 = scmp.eq.s32.totalorder %s17, 0
      %p116 = por %p114, %p115
      %p117 = scmp.ne.s32.totalorder %s106, %s109
      %p118 = scmp.eq.s32.totalorder %s22, 15
      %p119 = por %p117, %p118
      %p120 = scmp.ne.s32.totalorder %s109, %s110
      %p121 = scmp.eq.s32.totalorder %s22, 0
      %p122 = por %p120, %p121
      %p123 = scmp.ne.s32.totalorder %s109, %s110
      %p124 = scmp.eq.s32.totalorder %s23, 15
      %p125 = por %p123, %p124
      %p127 = scmp.ne.s32.totalorder %s110, %s126
      %p128 = scmp.eq.s32.totalorder %s23, 0
      %p129 = por %p127, %p128
      %p130 = scmp.le.s32.totalorder 1, %s17
      %p131 = scmp.lt.s32.totalorder %s17, 17
      %p132 = pnand %p130, %p131
      %p133 = pneg %p132
      // Predicated region
      $region9: #{tpu_custom_call.1} parent=5 // pred_check
        _
      $region10: #{tpu_custom_call.1} parent=5 // pred_check_branch
        %135 = sbr.rel (%p132) target = $region12
      $region11: #{tpu_custom_call.1} parent=5 // pred_region
        %s136 = ssub.s32 %s17, 1
      $region12: #{tpu_custom_call.1} parent=5 // pred_fallthru
        _
      %p137 = scmp.lt.s32.totalorder %s17, 16
      // Predicated region
      $region13: #{tpu_custom_call.1} parent=5 // pred_check
        %p138 = pneg %p137
      $region14: #{tpu_custom_call.1} parent=5 // pred_check_branch
        %140 = sbr.rel (%p138) target = $region16
      $region15: #{tpu_custom_call.1} parent=5 // pred_region
        // Predicated region
        $region17: #{tpu_custom_call.1} parent=15 // pred_check
          %p141 = pneg %p58
        $region18: #{tpu_custom_call.1} parent=15 // pred_check_branch
          %143 = sbr.rel (%p141) target = $region20
        $region19: #{tpu_custom_call.1} parent=15 // pred_region
          %s144 = sand.u32 %s48, 1
          %s145 = scalar_lea.sflag [#allocation3], %s144
          %s146 = sand.u32 %s48, 1
          %s147 = smul.addr %s146, 8
          %s148 = scalar_lea.vmem [#allocation2], %s147
          %s150 = ssub.s32 128, 128
          %151 = vsyncadd %s145, %s150
          %s152 = smul.addr %s24, 4
          %s153 = sadd.s32 %s25, %s152
          %s154 = smul.addr %s153, 128
          %s155 = scalar_lea.hbm %s0, %s154
          %s157 = sshll.u32 %s148, 4
          %s158 = int_to_ptr.vmem [resolvable:$true] %s157
          %160 = dma.hbm_to_vmem [thread:$0]  %s155, 128, %s158, %s145
        $region20: #{tpu_custom_call.1} parent=15 // pred_fallthru
          _
        // Predicated region
        $region21: #{tpu_custom_call.1} parent=15 // pred_check
          %p161 = pneg %p86
        $region22: #{tpu_custom_call.1} parent=15 // pred_check_branch
          %163 = sbr.rel (%p161) target = $region24
        $region23: #{tpu_custom_call.1} parent=15 // pred_region
          %s164 = sand.u32 %s76, 1
          %s165 = scalar_lea.sflag [#allocation6], %s164
          %s166 = sand.u32 %s76, 1
          %s167 = smul.addr %s166, 16
          %s168 = scalar_lea.vmem [#allocation5], %s167
          %s169 = smul.u32 2, %s26
          %s171 = ssub.s32 256, 256
          %172 = vsyncadd %s165, %s171
          %s173 = smul.addr %s24, 4
          %s174 = sadd.s32 %s169, %s173
          %s175 = smul.addr %s174, 128
          %s176 = scalar_lea.hbm %s1, %s175
          %s177 = sshll.u32 %s168, 4
          %s178 = int_to_ptr.vmem [resolvable:$true] %s177
          %183 = dma.hbm_to_vmem [thread:$0]  %s176, 256, %s178, %s165, 128, 128, 8
        $region24: #{tpu_custom_call.1} parent=15 // pred_fallthru
          _
      $region16: #{tpu_custom_call.1} parent=5 // pred_fallthru
        _
      %p184 = scmp.le.s32.totalorder 1, %s17
      %p185 = scmp.lt.s32.totalorder %s17, 17
      %p186 = pnand %p184, %p185
      %p187 = pneg %p186
      // Predicated region
      $region25: #{tpu_custom_call.1} parent=5 // pred_check
        _
      $region26: #{tpu_custom_call.1} parent=5 // pred_check_branch
        %189 = sbr.rel (%p186) target = $region28
      $region27: #{tpu_custom_call.1} parent=5 // pred_region
        %s190 = ssub.s32 %s17, 1
        %s191 = sand.u32 %s51, 1
        %s192 = scalar_lea.sflag [#allocation3], %s191
        %s193 = sand.u32 %s51, 1
        %s194 = smul.addr %s193, 8
        %s195 = scalar_lea.vmem [#allocation2], %s194
        // Predicated region
        $region29: #{tpu_custom_call.1} parent=27 // pred_check
          %p196 = pneg %p64
        $region30: #{tpu_custom_call.1} parent=27 // pred_check_branch
          %198 = sbr.rel (%p196) target = $region32
        $region31: #{tpu_custom_call.1} parent=27 // pred_region
          %199 = dma.done %s192, 128
        $region32: #{tpu_custom_call.1} parent=27 // pred_fallthru
          _
        %s200 = sand.u32 %s79, 1
        %s201 = scalar_lea.sflag [#allocation6], %s200
        %s202 = sand.u32 %s79, 1
        %s203 = smul.addr %s202, 16
        %s204 = scalar_lea.vmem [#allocation5], %s203
        // Predicated region
        $region33: #{tpu_custom_call.1} parent=27 // pred_check
          %p205 = pneg %p92
        $region34: #{tpu_custom_call.1} parent=27 // pred_check_branch
          %207 = sbr.rel (%p205) target = $region36
        $region35: #{tpu_custom_call.1} parent=27 // pred_region
          %208 = dma.done %s201, 256
        $region36: #{tpu_custom_call.1} parent=27 // pred_fallthru
          _
        %s209 = sand.u32 %s51, 1
        %s210 = scalar_lea.sflag [#allocation3], %s209
        %s211 = sand.u32 %s51, 1
        %s212 = smul.addr %s211, 8
        %s213 = scalar_lea.vmem [#allocation2], %s212
        %p214 = pneg %p64
        %p215 = pneg %p61
        %s216 = sand.u32 %s79, 1
        %s217 = scalar_lea.sflag [#allocation6], %s216
        %s218 = sand.u32 %s79, 1
        %s219 = smul.addr %s218, 16
        %s220 = scalar_lea.vmem [#allocation5], %s219
        %p221 = pneg %p92
        %p222 = pneg %p89
        %p223 = pneg %p122
        %p224 = pneg %p119
        %s225 = sand.u32 %s109, 1
        %s226 = scalar_lea.sflag [#allocation4], %s225
        %s227 = sand.u32 %s109, 1
        %s228 = smul.addr %s227, 128
        %s229 = scalar_lea.vmem [#allocation7], %s228
        %s230 = smul.u32 2, %s29
        %s231 = smul.u32 8, %s28
        %s232 = smul.u32 2, %s29
        %v233 = vld [vmem:[%s204] sm:$0xff]
        %v234 = vld [vmem:[%s204 + $0x8] sm:$0xff]
        %v235 = vld [vmem:[%s195] sm:$0x1]
        %v236 = vlaneseq
        %v237 = vshrl.u32 %v236, 7
        %v238 = vsub.s32 0, %v237
        %v239 = vrot.slane %v235, %v238
        %v240 = vadd.f32 %v239, %v233
        %v241 = vadd.f32 %v239, %v234
        %242 = vst [vmem:[%s229] sm:$0xff] %v240
        %243 = vst [vmem:[%s229 + $0x8] sm:$0xff] %v241
        %v244 = vld [vmem:[%s195 + $0x1] sm:$0x1]
        %v245 = vlaneseq
        %v246 = vshrl.u32 %v245, 7
        %v247 = vsub.s32 0, %v246
        %v248 = vrot.slane %v244, %v247
        %v249 = vadd.f32 %v248, %v233
        %v250 = vadd.f32 %v248, %v234
        %s251 = scalar_lea.vmem %s229, 16 [#allocation7]
        %252 = vst [vmem:[%s251] sm:$0xff] %v249
        %253 = vst [vmem:[%s251 + $0x8] sm:$0xff] %v250
        %v254 = vld [vmem:[%s195 + $0x2] sm:$0x1]
        %v255 = vlaneseq
        %v256 = vshrl.u32 %v255, 7
        %v257 = vsub.s32 0, %v256
        %v258 = vrot.slane %v254, %v257
        %v259 = vadd.f32 %v258, %v233
        %v260 = vadd.f32 %v258, %v234
        %s261 = scalar_lea.vmem %s229, 32 [#allocation7]
        %262 = vst [vmem:[%s261] sm:$0xff] %v259
        %263 = vst [vmem:[%s261 + $0x8] sm:$0xff] %v260
        %v264 = vld [vmem:[%s195 + $0x3] sm:$0x1]
        %v265 = vlaneseq
        %v266 = vshrl.u32 %v265, 7
        %v267 = vsub.s32 0, %v266
        %v268 = vrot.slane %v264, %v267
        %v269 = vadd.f32 %v268, %v233
        %v270 = vadd.f32 %v268, %v234
        %s271 = scalar_lea.vmem %s229, 48 [#allocation7]
        %272 = vst [vmem:[%s271] sm:$0xff] %v269
        %273 = vst [vmem:[%s271 + $0x8] sm:$0xff] %v270
        %v274 = vld [vmem:[%s195 + $0x4] sm:$0x1]
        %v275 = vlaneseq
        %v276 = vshrl.u32 %v275, 7
        %v277 = vsub.s32 0, %v276
        %v278 = vrot.slane %v274, %v277
        %v279 = vadd.f32 %v278, %v233
        %v280 = vadd.f32 %v278, %v234
        %s281 = scalar_lea.vmem %s229, 64 [#allocation7]
        %282 = vst [vmem:[%s281] sm:$0xff] %v279
        %283 = vst [vmem:[%s281 + $0x8] sm:$0xff] %v280
        %v284 = vld [vmem:[%s195 + $0x5] sm:$0x1]
        %v285 = vlaneseq
        %v286 = vshrl.u32 %v285, 7
        %v287 = vsub.s32 0, %v286
        %v288 = vrot.slane %v284, %v287
        %v289 = vadd.f32 %v288, %v233
        %v290 = vadd.f32 %v288, %v234
        %s291 = scalar_lea.vmem %s229, 80 [#allocation7]
        %292 = vst [vmem:[%s291] sm:$0xff] %v289
        %293 = vst [vmem:[%s291 + $0x8] sm:$0xff] %v290
        %v294 = vld [vmem:[%s195 + $0x6] sm:$0x1]
        %v295 = vlaneseq
        %v296 = vshrl.u32 %v295, 7
        %v297 = vsub.s32 0, %v296
        %v298 = vrot.slane %v294, %v297
        %v299 = vadd.f32 %v298, %v233
        %v300 = vadd.f32 %v298, %v234
        %s301 = scalar_lea.vmem %s229, 96 [#allocation7]
        %302 = vst [vmem:[%s301] sm:$0xff] %v299
        %303 = vst [vmem:[%s301 + $0x8] sm:$0xff] %v300
        %v304 = vld [vmem:[%s195 + $0x7] sm:$0x1]
        %v305 = vlaneseq
        %v306 = vshrl.u32 %v305, 7
        %v307 = vsub.s32 0, %v306
        %v308 = vrot.slane %v304, %v307
        %v309 = vadd.f32 %v308, %v233
        %v310 = vadd.f32 %v308, %v234
        %s311 = scalar_lea.vmem %s229, 112 [#allocation7]
        %312 = vst [vmem:[%s311] sm:$0xff] %v309
        %313 = vst [vmem:[%s311 + $0x8] sm:$0xff] %v310
        %s314 = sand.u32 %s109, 1
        %s315 = scalar_lea.sflag [#allocation4], %s314
        %s316 = sand.u32 %s109, 1
        %s317 = smul.addr %s316, 128
        %s318 = scalar_lea.vmem [#allocation7], %s317
        // Predicated region
        $region37: #{tpu_custom_call.1} parent=27 // pred_check
          %p319 = pneg %p119
        $region38: #{tpu_custom_call.1} parent=27 // pred_check_branch
          %321 = sbr.rel (%p319) target = $region40
        $region39: #{tpu_custom_call.1} parent=27 // pred_region
          #allocation9 [shape = 'u32[6]{0}', space=smem, size = 0x18, scoped, tag = 'DMA stride descriptor']
          %s322 = smul.u32 8, %s28
          %s323 = smul.u32 2, %s29
          %s325 = ssub.s32 2048, 2048
          %326 = vsyncadd %s315, %s325
          %s327 = smul.addr %s322, 4
          %s328 = sadd.s32 %s323, %s327
          %s329 = smul.addr %s27, 128
          %s330 = sadd.s32 %s328, %s329
          %s331 = smul.addr %s330, 128
          %s332 = scalar_lea.hbm %s2, %s331
          %s334 = sshll.u32 1, 14
          %s335 = sxor.u32 4294967295, %s334
          %s338 = sshll.u32 7, 18
          %s339 = sxor.u32 4294967295, %s338
          %s340 = sand.u32 0, %s339
          %s342 = sor.u32 %s340, 0
          %s344 = sshll.u32 3, 24
          %s345 = sxor.u32 4294967295, %s344
          %s346 = sand.u32 %s342, %s345
          %s348 = sor.u32 %s346, 0
          %s349 = sshll.u32 %s318, 4
          %s350 = int_to_ptr.vmem [resolvable:$true] %s349
          %356 = sst [smem:[#allocation9]] 256
          %s357 = scalar_lea.smem [#allocation9], 1
          %358 = sst [smem:[%s357]] 512
          %s359 = scalar_lea.smem [#allocation9], 2
          %360 = sst [smem:[%s359]] 2
          %s361 = scalar_lea.smem [#allocation9], 3
          %362 = sst [smem:[%s361]] 128
          %s363 = scalar_lea.smem [#allocation9], 4
          %364 = sst [smem:[%s363]] 128
          %s365 = scalar_lea.smem [#allocation9], 5
          %366 = sst [smem:[%s365]] 8
          %368 = dma.general %s350, 2048, %s332, %s315, [#allocation8], [#allocation9], %s348, 0
        $region40: #{tpu_custom_call.1} parent=27 // pred_fallthru
          _
      $region28: #{tpu_custom_call.1} parent=5 // pred_fallthru
        _
      %p369 = scmp.le.s32.totalorder 2, %s17
      // Predicated region
      $region41: #{tpu_custom_call.1} parent=5 // pred_check
        %p370 = pneg %p369
      $region42: #{tpu_custom_call.1} parent=5 // pred_check_branch
        %372 = sbr.rel (%p370) target = $region44
      $region43: #{tpu_custom_call.1} parent=5 // pred_region
        %s373 = ssub.s32 %s17, 2
        // Predicated region
        $region45: #{tpu_custom_call.1} parent=43 // pred_check
          %p374 = pneg %p125
        $region46: #{tpu_custom_call.1} parent=43 // pred_check_branch
          %376 = sbr.rel (%p374) target = $region48
        $region47: #{tpu_custom_call.1} parent=43 // pred_region
          %s377 = sand.u32 %s110, 1
          %s378 = scalar_lea.sflag [#allocation4], %s377
          %s379 = sand.u32 %s110, 1
          %s380 = smul.addr %s379, 128
          %s381 = scalar_lea.vmem [#allocation7], %s380
          %382 = dma.done %s378, 2048
        $region48: #{tpu_custom_call.1} parent=43 // pred_fallthru
          _
      $region44: #{tpu_custom_call.1} parent=5 // pred_fallthru
        _
    $region6: #{tpu_custom_call.1} parent=1 // loop_footer
      %s21 = sadd.s32 1, %s17
    $region7: #{tpu_custom_call.1} parent=1 // loop_footer_branch
      %16 = sbr.rel target = $region3
    $region8: #{tpu_custom_call.1} parent=1 // loop_exit
      _
    %383 = vsyncpa [#allocation3], 1
    %s384 = scalar_lea.sflag [#allocation3], 1
    %385 = vsyncpa %s384, 1
    %386 = vsyncpa [#allocation6], 1
    %s387 = scalar_lea.sflag [#allocation6], 1
    %388 = vsyncpa %s387, 1
    %389 = vsyncpa [#allocation4], 1
    %s390 = scalar_lea.sflag [#allocation4], 1
    %391 = vsyncpa %s390, 1

</llo_original>
